<compile_context>
chip_gen: v7x
topology: tpu7x:2x2x1
jax: 0.10.0
libtpu: 0.0.40
codegen_flags: <defaults>
</compile_context>

<pallas_src>
import jax
import jax.numpy as jnp
import numpy as np
from jax.experimental import pallas as pl
from jax.experimental.pallas import tpu as pltpu


# ----------------------------------------------------------------------------
# Generic row-tiled matmul + bias kernel (input projection and fc head).
# ----------------------------------------------------------------------------
def _matmul_bias_kernel(x_ref, w_ref, b_ref, o_ref):
    o_ref[...] = (
        jnp.dot(x_ref[...], w_ref[...], preferred_element_type=jnp.float32)
        + b_ref[...]
    ).astype(o_ref.dtype)


def matmul_bias(x2d, w, b, *, row_block=256):
    """x2d: (N, K), w: (K, O), b: (1, O) -> (N, O) float32, tiled over rows."""
    N, K = x2d.shape
    O = w.shape[1]
    rb = N if N <= row_block else row_block      # row_block is a multiple of 8
    return pl.pallas_call(
        _matmul_bias_kernel,
        out_shape=jax.ShapeDtypeStruct((N, O), jnp.float32),
        grid=(pl.cdiv(N, rb),),
        in_specs=[
            pl.BlockSpec((rb, K), lambda i: (i, 0)),
            pl.BlockSpec((K, O), lambda i: (0, 0)),
            pl.BlockSpec((1, O), lambda i: (0, 0)),
        ],
        out_specs=pl.BlockSpec((rb, O), lambda i: (i, 0)),
        compiler_params=pltpu.CompilerParams(
            dimension_semantics=("parallel",)),
    )(x2d, w, b)


# ----------------------------------------------------------------------------
# Fused bidirectional LSTM recurrence: whole sequence in one invocation.
# gx holds the precomputed input projections for both directions:
#   gx[t, :, 0:4H]  = x[t] @ W_ih_fwd^T + b_fwd     (gate order i, f, g, o)
#   gx[t, :, 4H:8H] = x[t] @ W_ih_rev^T + b_rev
# ----------------------------------------------------------------------------
def _bilstm_recurrent_kernel(gx_ref, whh_f_ref, whh_r_ref, out_ref,
                             h_f, c_f, h_r, c_r, out_f_sc, out_r_sc):
    T = gx_ref.shape[0]
    H = whh_f_ref.shape[0]

    h_f[...] = jnp.zeros_like(h_f)
    c_f[...] = jnp.zeros_like(c_f)
    h_r[...] = jnp.zeros_like(h_r)
    c_r[...] = jnp.zeros_like(c_r)

    def cell(gates, c_prev):
        # PyTorch gate ordering: input, forget, cell (g), output.
        i_g = jax.nn.sigmoid(gates[:, 0 * H:1 * H])
        f_g = jax.nn.sigmoid(gates[:, 1 * H:2 * H])
        g_g = jnp.tanh(gates[:, 2 * H:3 * H])
        o_g = jax.nn.sigmoid(gates[:, 3 * H:4 * H])
        c_new = f_g * c_prev + i_g * g_g
        h_new = o_g * jnp.tanh(c_new)
        return h_new, c_new

    def step(t, carry):
        # Forward direction processes time t.
        g_f = gx_ref[t, :, pl.ds(0, 4 * H)] + jnp.dot(
            h_f[...], whh_f_ref[...], preferred_element_type=jnp.float32)
        hf, cf = cell(g_f, c_f[...])
        h_f[...] = hf
        c_f[...] = cf
        out_f_sc[t] = hf

        # Reverse direction processes time T-1-t.
        tr = T - 1 - t
        g_r = gx_ref[tr, :, pl.ds(4 * H, 4 * H)] + jnp.dot(
            h_r[...], whh_r_ref[...], preferred_element_type=jnp.float32)
        hr, cr = cell(g_r, c_r[...])
        h_r[...] = hr
        c_r[...] = cr
        out_r_sc[tr] = hr
        return carry

    jax.lax.fori_loop(0, T, step, 0)

    # Single lane-dense writeback of the whole (T, B, 2H) slab.
    out_ref[:, :, 0:H] = out_f_sc[...].astype(out_ref.dtype)
    out_ref[:, :, H:2 * H] = out_r_sc[...].astype(out_ref.dtype)


def bilstm_layer(x, w_ih_cat, b_cat, whh_f_t, whh_r_t):
    """One bidirectional LSTM layer.  x: (T, B, I) -> (T, B, 2H)."""
    T, B, I = x.shape
    H = whh_f_t.shape[0]

    # (1) Hoisted input projection for both directions as one big matmul.
    gx = matmul_bias(x.reshape(T * B, I), w_ih_cat, b_cat)    # (T*B, 8H)
    gx = gx.reshape(T, B, 8 * H)

    # (2) Fused bidirectional recurrence, whole sequence inside one kernel.
    # TODO(synk): for very long sequences, chunk the time axis over a grid
    # (resident h/c scratch) instead of loading all of gx into VMEM at once.
    return pl.pallas_call(
        _bilstm_recurrent_kernel,
        out_shape=jax.ShapeDtypeStruct((T, B, 2 * H), jnp.float32),
        grid=(1,),
        in_specs=[
            pl.BlockSpec((T, B, 8 * H), lambda i: (0, 0, 0)),
            pl.BlockSpec((H, 4 * H), lambda i: (0, 0)),
            pl.BlockSpec((H, 4 * H), lambda i: (0, 0)),
        ],
        out_specs=pl.BlockSpec((T, B, 2 * H), lambda i: (0, 0, 0)),
        scratch_shapes=[
            pltpu.VMEM((B, H), jnp.float32),      # h forward
            pltpu.VMEM((B, H), jnp.float32),      # c forward
            pltpu.VMEM((B, H), jnp.float32),      # h reverse
            pltpu.VMEM((B, H), jnp.float32),      # c reverse
            pltpu.VMEM((T, B, H), jnp.float32),   # forward outputs
            pltpu.VMEM((T, B, H), jnp.float32),   # reverse outputs
        ],
        compiler_params=pltpu.CompilerParams(
            dimension_semantics=("arbitrary",)),
    )(gx, whh_f_t, whh_r_t)


# ----------------------------------------------------------------------------
# BiLSTM forward (matches torch module semantics, dropout=0.0 / eval).
# ----------------------------------------------------------------------------
def bilstm_forward(x, params):
    """x: (T, B, num_inputs).  Returns (T, B, num_outputs)."""
    T, B, _ = x.shape
    layer_in = x
    for lp in params["layers"]:
        layer_in = bilstm_layer(layer_in, lp["w_ih_cat"], lp["b_cat"],
                                lp["whh_f_t"], lp["whh_r_t"])
        # TODO(synk): inter-layer dropout omitted (dropout=0.0 / eval mode).
    feat = layer_in.shape[-1]
    out2d = matmul_bias(layer_in.reshape(T * B, feat),
                        params["fc_w_t"], params["fc_b"])
    return out2d.reshape(T, B, -1)


# ----------------------------------------------------------------------------
# Pure-JAX reference (sanity check against the Pallas kernels).
# ----------------------------------------------------------------------------
def _ref_direction(x, w_ih_t, w_hh_t, b, reverse):
    T, B, _ = x.shape
    H = w_hh_t.shape[0]
    xs = x[::-1] if reverse else x

    def step(carry, x_t):
        h, c = carry
        gates = x_t @ w_ih_t + h @ w_hh_t + b
        i = jax.nn.sigmoid(gates[:, :H])
        f = jax.nn.sigmoid(gates[:, H:2 * H])
        g = jnp.tanh(gates[:, 2 * H:3 * H])
        o = jax.nn.sigmoid(gates[:, 3 * H:])
        c = f * c + i * g
        h = o * jnp.tanh(c)
        return (h, c), h

    init = (jnp.zeros((B, H), jnp.float32), jnp.zeros((B, H), jnp.float32))
    _, hs = jax.lax.scan(step, init, xs)
    return hs[::-1] if reverse else hs


def bilstm_reference(x, params):
    T, B, _ = x.shape
    layer_in = x
    for lp in params["layers"]:
        H = lp["whh_f_t"].shape[0]
        outs = []
        for d in range(2):
            w_ih_t = lp["w_ih_cat"][:, d * 4 * H:(d + 1) * 4 * H]
            b = lp["b_cat"][:, d * 4 * H:(d + 1) * 4 * H]
            whh_t = lp["whh_f_t"] if d == 0 else lp["whh_r_t"]
            outs.append(_ref_direction(layer_in, w_ih_t, whh_t, b, bool(d)))
        layer_in = jnp.concatenate(outs, axis=-1)
    out = layer_in.reshape(T * B, -1) @ params["fc_w_t"] + params["fc_b"]
    return out.reshape(T, B, -1)


# ----------------------------------------------------------------------------
# Deterministic parameter init (shapes follow nn.LSTM / nn.LazyLinear).
# ----------------------------------------------------------------------------
def init_params(key, num_inputs, num_hiddens, num_layers, num_outputs):
    H = num_hiddens
    scale = 1.0 / np.sqrt(H)
    layers = []
    for layer in range(num_layers):
        in_size = num_inputs if layer == 0 else 2 * H
        w_ih_t, b_dir, whh_t = [], [], []
        for _ in range(2):  # forward, backward
            key, k1, k2, k3, k4 = jax.random.split(key, 5)
            w_ih = jax.random.uniform(k1, (4 * H, in_size), jnp.float32,
                                      -scale, scale)
            w_hh = jax.random.uniform(k2, (4 * H, H), jnp.float32,
                                      -scale, scale)
            b_ih = jax.random.uniform(k3, (4 * H,), jnp.float32, -scale, scale)
            b_hh = jax.random.uniform(k4, (4 * H,), jnp.float32, -scale, scale)
            w_ih_t.append(w_ih.T)          # (in, 4H)
            whh_t.append(w_hh.T)           # (H, 4H)
            b_dir.append(b_ih + b_hh)      # (4H,)
        layers.append({
            "w_ih_cat": jnp.concatenate(w_ih_t, axis=1),    # (in, 8H)
            "b_cat": jnp.concatenate(b_dir)[None, :],       # (1, 8H)
            "whh_f_t": whh_t[0],
            "whh_r_t": whh_t[1],
        })
    key, k1, k2 = jax.random.split(key, 3)
    fc_scale = 1.0 / np.sqrt(2 * H)
    fc_w = jax.random.uniform(k1, (num_outputs, 2 * H), jnp.float32,
                              -fc_scale, fc_scale)
    fc_b = jax.random.uniform(k2, (num_outputs,), jnp.float32,
                              -fc_scale, fc_scale)
    return {"layers": layers, "fc_w_t": fc_w.T, "fc_b": fc_b[None, :]}


if __name__ == "__main__":
    T, B = 8, 2
    num_inputs, num_hiddens, num_layers, num_outputs = 16, 32, 2, 10

    key = jax.random.PRNGKey(0)
    key, xkey = jax.random.split(key)
    x = jax.random.normal(xkey, (T, B, num_inputs), jnp.float32)
    params = init_params(key, num_inputs, num_hiddens, num_layers, num_outputs)

    out = jax.block_until_ready(bilstm_forward(x, params))
    ref = jax.block_until_ready(bilstm_reference(x, params))

    assert out.shape == (T, B, num_outputs), out.shape
    np.testing.assert_allclose(np.asarray(out), np.asarray(ref),
                               rtol=1e-4, atol=1e-4)
    print("KERNEL_OK")
</pallas_src>

<mosaic_0001>
module attributes {stable_mosaic.version = 11 : i64} {
  func.func @_matmul_bias_kernel(%arg0: i32, %arg1: memref<16x16xf32, #tpu.memory_space<vmem>>, %arg2: memref<16x256xf32, #tpu.memory_space<vmem>>, %arg3: memref<1x256xf32, #tpu.memory_space<vmem>>, %arg4: memref<16x256xf32, #tpu.memory_space<vmem>>) attributes {dimension_semantics = [#tpu.dimension_semantics<parallel>], iteration_bounds = array<i64: 1>, scalar_prefetch = 0 : i64, scratch_operands = 0 : i64, tpu.core_type = #tpu.core_type<tc>, window_params = [{transform_indices = @transform_0, window_bounds = array<i64: 16, 16>}, {pipeline_mode = #tpu.pipeline_mode<synchronous>, transform_indices = @transform_1, window_bounds = array<i64: 16, 256>}, {pipeline_mode = #tpu.pipeline_mode<synchronous>, transform_indices = @transform_2, window_bounds = array<i64: 1, 256>}, {transform_indices = @transform_3, window_bounds = array<i64: 16, 256>}]} {
    %c0 = arith.constant 0 : index
    %c0_0 = arith.constant 0 : index
    %0 = vector.load %arg1[%c0, %c0_0] : memref<16x16xf32, #tpu.memory_space<vmem>>, vector<16x16xf32>
    %c0_1 = arith.constant 0 : index
    %c0_2 = arith.constant 0 : index
    %1 = vector.load %arg2[%c0_1, %c0_2] : memref<16x256xf32, #tpu.memory_space<vmem>>, vector<16x256xf32>
    %cst = arith.constant dense<0.000000e+00> : vector<16x256xf32>
    %2 = tpu.matmul %0, %1, %cst {dimension_numbers = #tpu.dot_dimension_numbers<[1], [0], [0], [1], [0, 0, 1, 1], [], []>} : vector<16x16xf32>, vector<16x256xf32>, vector<16x256xf32> -> vector<16x256xf32>
    %c0_3 = arith.constant 0 : index
    %c0_4 = arith.constant 0 : index
    %3 = vector.load %arg3[%c0_3, %c0_4] : memref<1x256xf32, #tpu.memory_space<vmem>>, vector<1x256xf32>
    %4 = vector.broadcast %3 : vector<1x256xf32> to vector<16x256xf32>
    %5 = arith.addf %2, %4 : vector<16x256xf32>
    %c0_5 = arith.constant 0 : index
    %c0_6 = arith.constant 0 : index
    %6 = vector.load %arg4[%c0_5, %c0_6] : memref<16x256xf32, #tpu.memory_space<vmem>>, vector<16x256xf32>
    tpu.vector_store %arg4[%c0_5, %c0_6], %5 {strides = array<i32>} : memref<16x256xf32, #tpu.memory_space<vmem>>, vector<16x256xf32>,
    return
  }
  func.func @transform_0(%arg0: i32) -> (i32, i32) {
    %c0_i32 = arith.constant 0 : i32
    %c0_i32_0 = arith.constant 0 : i32
    return %arg0, %c0_i32 : i32, i32
  }
  func.func @transform_1(%arg0: i32) -> (i32, i32) {
    %c0_i32 = arith.constant 0 : i32
    %c0_i32_0 = arith.constant 0 : i32
    %c0_i32_1 = arith.constant 0 : i32
    return %c0_i32, %c0_i32_0 : i32, i32
  }
  func.func @transform_2(%arg0: i32) -> (i32, i32) {
    %c0_i32 = arith.constant 0 : i32
    %c0_i32_0 = arith.constant 0 : i32
    %c0_i32_1 = arith.constant 0 : i32
    return %c0_i32, %c0_i32_0 : i32, i32
  }
  func.func @transform_3(%arg0: i32) -> (i32, i32) {
    %c0_i32 = arith.constant 0 : i32
    %c0_i32_0 = arith.constant 0 : i32
    return %arg0, %c0_i32 : i32, i32
  }
}

</mosaic_0001>

<llo_original>
// kernel: tpu_custom_call.1
$region0: #{tpu_custom_call.1}
  #allocation0 [shape = 'u32[]', space=smem, size = 0x4, offset = 0x4, fixed_abs, tag = 'smem constant byte address 0x4 - core index']
  #allocation1 [shape = 'u32[144,128]{1,0:T(1,128)}', space=vmem, size = 0x12000, scoped, tag = 'internal scratch']
  %s0 = inlined_call_operand.hbm [shape: f32[16,16], index: 0, kind: input, shape index: {}]
  %s1 = inlined_call_operand.hbm [shape: f32[16,256], index: 1, kind: input, shape index: {}]
  %s2 = inlined_call_operand.vmem [shape: f32[1,256], index: 2, kind: input, shape index: {}]
  %s3 = inlined_call_operand.hbm [shape: f32[16,256], index: 3, kind: output, shape index: {}]
  %s4 = sld [smem:[#allocation0]]
  $region30: #{tpu_custom_call.1} parent=0
    _
  %s6 = ssub.s32 1, %s4
  %s7 = scalar_select 0, %s6, %s4
  $region1: #{tpu_custom_call.1} parent=0
    #allocation2 [shape = 'u8[8192]{0}', space=vmem, size = 0x2000, scoped, tag = 'input window, operand 0, single buffered']
    #allocation3 [shape = 's32[1]{0}', space=sflag, size = 0x4, scoped, tag = 'scoped memory for tpu_custom_call.1']
    #allocation4 [shape = 's32[1]{0}', space=sflag, size = 0x4, scoped, tag = 'scoped memory for tpu_custom_call.1']
    #allocation5 [shape = 'u8[16384]{0}', space=vmem, size = 0x4000, scoped, tag = 'input window, operand 1, single buffered']
    #allocation6 [shape = 's32[1]{0}', space=sflag, size = 0x4, scoped, tag = 'scoped memory for tpu_custom_call.1']
    #allocation7 [shape = 'u8[16384]{0}', space=vmem, size = 0x4000, scoped, tag = 'output window, operand 0, single buffered']
    %8 = vsyncpa [#allocation3], 0
    %9 = vsyncpa [#allocation6], 0
    %10 = vsyncpa [#allocation4], 0
    // Predicated region
    $region2: #{tpu_custom_call.1} parent=1 // pred_check
      _
    $region3: #{tpu_custom_call.1} parent=1 // pred_check_branch
      %12 = sbr.rel (0) target = $region5
    $region4: #{tpu_custom_call.1} parent=1 // pred_region
      %s14 = ssub.s32 256, 256
      %15 = vsyncadd [#allocation3], %s14
      %s16 = sshll.u32 [#allocation2], 4
      %s17 = int_to_ptr.vmem [resolvable:$true] %s16
      %22 = dma.hbm_to_vmem [thread:$0]  %s0, 256, %s17, [#allocation3], 128, 128, 8
    $region5: #{tpu_custom_call.1} parent=1 // pred_fallthru
      _
    // Predicated region
    $region6: #{tpu_custom_call.1} parent=1 // pred_check
      _
    $region7: #{tpu_custom_call.1} parent=1 // pred_check_branch
      %24 = sbr.rel (0) target = $region9
    $region8: #{tpu_custom_call.1} parent=1 // pred_region
      %s26 = ssub.s32 512, 512
      %27 = vsyncadd [#allocation6], %s26
      %s28 = sshll.u32 [#allocation5], 4
      %s29 = int_to_ptr.vmem [resolvable:$true] %s28
      %34 = dma.hbm_to_vmem [thread:$0]  %s1, 512, %s29, [#allocation6], 256, 256, 16
    $region9: #{tpu_custom_call.1} parent=1 // pred_fallthru
      _
    // Predicated region
    $region10: #{tpu_custom_call.1} parent=1 // pred_check
      _
    $region11: #{tpu_custom_call.1} parent=1 // pred_check_branch
      %36 = sbr.rel (0) target = $region13
    $region12: #{tpu_custom_call.1} parent=1 // pred_region
      _
    $region13: #{tpu_custom_call.1} parent=1 // pred_fallthru
      _
    // Predicated region
    $region14: #{tpu_custom_call.1} parent=1 // pred_check
      _
    $region15: #{tpu_custom_call.1} parent=1 // pred_check_branch
      %38 = sbr.rel (0) target = $region17
    $region16: #{tpu_custom_call.1} parent=1 // pred_region
      %39 = dma.done [#allocation3], 256
    $region17: #{tpu_custom_call.1} parent=1 // pred_fallthru
      _
    // Predicated region
    $region18: #{tpu_custom_call.1} parent=1 // pred_check
      _
    $region19: #{tpu_custom_call.1} parent=1 // pred_check_branch
      %41 = sbr.rel (0) target = $region21
    $region20: #{tpu_custom_call.1} parent=1 // pred_region
      %42 = dma.done [#allocation6], 512
    $region21: #{tpu_custom_call.1} parent=1 // pred_fallthru
      _
    %v43 = vld [vmem:[#allocation2] sm:$0xff]
    %v44 = vld [vmem:[#allocation2 + $0x8] sm:$0xff]
    %v45 = vld [vmem:[#allocation5] sm:$0xff]
    %v46 = vld [vmem:[#allocation5 + $0x8] sm:$0xff]
    %v47 = vld [vmem:[#allocation5 + $0x10] sm:$0xff]
    %v48 = vld [vmem:[#allocation5 + $0x18] sm:$0xff]
    %v49 = vld [vmem:[%s2] sm:$0x3]
    %v51 = vlaneseq
    %v52 = vshrl.u32 %v51, 7
    %v53 = vsub.s32 0, %v52
    %v54 = vrot.slane %v49, %v53
    %v55 = vlaneseq
    %v56 = vshrl.u32 %v55, 7
    %v57 = vsub.s32 1, %v56
    %v58 = vrot.slane %v49, %v57
    %vm61 = vcmask 130048
    %v63 = vsel %vm61, %v43, 0
    %v66 = vsel %vm61, %v44, 0
    %68 = vmatprep.subr.mxu0 %v46
    %69 = vmatpush1.msra.mxu0 %v45
    %70 = vmatprep.subr.mxu0 %v48
    %71 = vmatpush1.msra.mxu0 %v47
    %72 = vmatprep.subr.mxu0 0.0
    %73 = vmatpush1.msra.mxu0 0.0
    %74 = vmatprep.subr.mxu0 0.0
    %75 = vmatpush1.msra.mxu0 0.0
    %76 = vmatprep.subr.mxu0 0.0
    %77 = vmatpush1.msra.mxu0 0.0
    %78 = vmatprep.subr.mxu0 0.0
    %79 = vmatpush1.msra.mxu0 0.0
    %80 = vmatprep.subr.mxu0 0.0
    %81 = vmatpush1.msra.mxu0 0.0
    %82 = vmatprep.subr.mxu0 0.0
    %83 = vmatpush1.msra.mxu0 0.0
    %84 = vmatprep.subr.mxu0 0.0
    %85 = vmatpush1.msra.mxu0 0.0
    %86 = vmatprep.subr.mxu0 0.0
    %87 = vmatpush1.msra.mxu0 0.0
    %88 = vmatprep.subr.mxu0 0.0
    %89 = vmatpush1.msra.mxu0 0.0
    %90 = vmatprep.subr.mxu0 0.0
    %91 = vmatpush1.msra.mxu0 0.0
    %92 = vmatprep.subr.mxu0 0.0
    %93 = vmatpush1.msra.mxu0 0.0
    %94 = vmatprep.subr.mxu0 0.0
    %95 = vmatpush1.msra.mxu0 0.0
    %96 = vmatprep.subr.mxu0 0.0
    %97 = vmatpush1.msra.mxu0 0.0
    %98 = vmatprep.subr.mxu0 0.0
    %99 = vmatpush1.msra.mxu0 0.0
    %100 = vmatprep.subr.mxu0 0.0
    %101 = vmatpush1.msra.mxu0 0.0
    %102 = vmatprep.subr.mxu0 0.0
    %103 = vmatpush1.msra.mxu0 0.0
    %104 = vmatprep.subr.mxu0 0.0
    %105 = vmatpush1.msra.mxu0 0.0
    %106 = vmatprep.subr.mxu0 0.0
    %107 = vmatpush1.msra.mxu0 0.0
    %108 = vmatprep.subr.mxu0 0.0
    %109 = vmatpush1.msra.mxu0 0.0
    %110 = vmatprep.subr.mxu0 0.0
    %111 = vmatpush1.msra.mxu0 0.0
    %112 = vmatprep.subr.mxu0 0.0
    %113 = vmatpush1.msra.mxu0 0.0
    %114 = vmatprep.subr.mxu0 0.0
    %115 = vmatpush1.msra.mxu0 0.0
    %116 = vmatprep.subr.mxu0 0.0
    %117 = vmatpush1.msra.mxu0 0.0
    %118 = vmatprep.subr.mxu0 0.0
    %119 = vmatpush1.msra.mxu0 0.0
    %120 = vmatprep.subr.mxu0 0.0
    %121 = vmatpush1.msra.mxu0 0.0
    %122 = vmatprep.subr.mxu0 0.0
    %123 = vmatpush1.msra.mxu0 0.0
    %124 = vmatprep.subr.mxu0 0.0
    %125 = vmatpush1.msra.mxu0 0.0
    %126 = vmatprep.subr.mxu0 0.0
    %127 = vmatpush1.msra.mxu0 0.0
    %128 = vmatprep.subr.mxu0 0.0
    %129 = vmatpush1.msra.mxu0 0.0
    %130 = vmatprep.subr.mxu0 0.0
    %131 = vmatpush1.msra.mxu0 0.0
    %132 = vmatprep.mubr.f32.mxu0 0.0
    %133 = vmatmul.mubr.f32.gmra.mrb[0].mxu0 %v63
    %v134 = vpop.f32.mrb[0].mxu0
    %v135 = vadd.f32 %v54, %v134
    %v136 = vpop.f32.mrb[0].mxu0
    %v137 = vadd.f32 %v58, %v136
    %138 = vmatprep.mubr.f32.mxu0 0.0
    %139 = vmatmul.mubr.f32.gmra.mrb[0].mxu0 %v66
    %v140 = vpop.f32.mrb[0].mxu0
    %v141 = vadd.f32 %v54, %v140
    %v142 = vpop.f32.mrb[0].mxu0
    %v143 = vadd.f32 %v58, %v142
    %144 = vdwg.mxu0
    %145 = vst [vmem:[#allocation7] sm:$0xff] %v135
    %146 = vst [vmem:[#allocation7 + $0x8] sm:$0xff] %v137
    %147 = vst [vmem:[#allocation7 + $0x10] sm:$0xff] %v141
    %148 = vst [vmem:[#allocation7 + $0x18] sm:$0xff] %v143
    // Predicated region
    $region22: #{tpu_custom_call.1} parent=1 // pred_check
      _
    $region23: #{tpu_custom_call.1} parent=1 // pred_check_branch
      %150 = sbr.rel (0) target = $region25
    $region24: #{tpu_custom_call.1} parent=1 // pred_region
      %s152 = ssub.s32 512, 512
      %153 = vsyncadd [#allocation4], %s152
      %s154 = sshll.u32 [#allocation7], 4
      %s155 = int_to_ptr.vmem [resolvable:$true] %s154
      %160 = dma.vmem_to_hbm [thread:$0]  %s155, 512, %s3, [#allocation4], 256, 256, 16
    $region25: #{tpu_custom_call.1} parent=1 // pred_fallthru
      _
    // Predicated region
    $region26: #{tpu_custom_call.1} parent=1 // pred_check
      _
    $region27: #{tpu_custom_call.1} parent=1 // pred_check_branch
      %162 = sbr.rel (0) target = $region29
    $region28: #{tpu_custom_call.1} parent=1 // pred_region
      %163 = dma.done [#allocation4], 512
    $region29: #{tpu_custom_call.1} parent=1 // pred_fallthru
      _
    %164 = vsyncpa [#allocation3], 1
    %165 = vsyncpa [#allocation6], 1
    %166 = vsyncpa [#allocation4], 1

</llo_original>
